<compile_context>
chip_gen: v6e
topology: v6e:2x2x1
jax: 0.10.0
libtpu: 0.0.40
codegen_flags: <defaults>
</compile_context>

<pallas_src>
import functools
import math

import jax
import jax.numpy as jnp
from jax.experimental import pallas as pl
from jax.experimental.pallas import tpu as pltpu

_LANE = 128


# ----------------------------------------------------------------------------
# Fused Pallas kernel: the whole L-layer BootGCN forward in one body.
# ----------------------------------------------------------------------------
def _boot_gcn_kernel(*refs, num_layers, disable_global):
    if disable_global:
        (es_ref, ps_ref, ep_ref, pe_ref,
         wp_ref, bp_ref, we_ref, be_ref,
         es_out_ref, ps_out_ref) = refs
        onehot = None
    else:
        (onehot_ref, es_ref, ps_ref, ep_ref, pe_ref,
         wp_ref, bp_ref, we_ref, be_ref, wg_ref, bg_ref,
         es_out_ref, ps_out_ref) = refs
        onehot = onehot_ref[...]                     # [S, E]  bf16 (exact 0/1)

    es = es_ref[...]                                 # [E, Fp] f32
    ps = ps_ref[...]                                 # [P, Fp] f32
    ep = ep_ref[...]                                 # [E, P]  bf16
    pe = pe_ref[...]                                 # [P, E]  bf16

    # L is small & static -> Python unroll is fine (switch to
    # lax.fori_loop(..., unroll=True) if L ever grows large).
    for l in range(num_layers):
        es_b = es.astype(jnp.bfloat16)

        if not disable_global:
            # seeds = es[seed_index] via one-hot matmul (gather on the MXU).
            seeds = jnp.dot(onehot, es_b, preferred_element_type=jnp.float32)

        # predicate update: aggregate entities -> linear -> ReLU
        p_agg = jnp.dot(pe, es_b, preferred_element_type=jnp.float32)
        ps = jnp.maximum(
            jnp.dot(p_agg.astype(jnp.bfloat16), wp_ref[l],
                    preferred_element_type=jnp.float32) + bp_ref[l], 0.0)

        # entity update: aggregate predicates -> linear -> ReLU
        e_agg = jnp.dot(ep, ps.astype(jnp.bfloat16),
                        preferred_element_type=jnp.float32)
        es = jnp.maximum(
            jnp.dot(e_agg.astype(jnp.bfloat16), we_ref[l],
                    preferred_element_type=jnp.float32) + be_ref[l], 0.0)

        if not disable_global:
            # seed-driven global signal broadcast to all entities
            g_all = jnp.maximum(
                jnp.dot(seeds.astype(jnp.bfloat16), wg_ref[l],
                        preferred_element_type=jnp.float32) + bg_ref[l], 0.0)
            es = es + jnp.mean(g_all, axis=0, keepdims=True)

    es_out_ref[...] = es.astype(es_out_ref.dtype)
    ps_out_ref[...] = ps.astype(ps_out_ref.dtype)


# ----------------------------------------------------------------------------
# Wrapper: lane-dense padding, bf16 operand prep, one pallas_call.
# ----------------------------------------------------------------------------
def _pad_last(x, target):
    pad = target - x.shape[-1]
    if pad == 0:
        return x
    widths = [(0, 0)] * (x.ndim - 1) + [(0, pad)]
    return jnp.pad(x, widths)


def boot_gcn_forward(params, opt, seed_index, es, ps, ep_adj, pe_adj):
    """BootGCN.forward: one grid-less pallas_call, everything resident in VMEM."""
    L = int(opt["layer"])
    disable_global = bool(opt["disable_global"])

    E, F = es.shape
    P = ps.shape[0]
    Fp = max(_LANE, ((F + _LANE - 1) // _LANE) * _LANE)   # lane-dense features

    # f32 activations, zero-padded to a multiple of 128 lanes.
    es_p = _pad_last(es.astype(jnp.float32), Fp)          # [E, Fp]
    ps_p = _pad_last(ps.astype(jnp.float32), Fp)          # [P, Fp]
    # bf16 MXU operands (0/1 + zero padding exact; 1/deg loses a few ULPs).
    ep_b = ep_adj.astype(jnp.bfloat16)                    # [E, P]
    pe_b = pe_adj.astype(jnp.bfloat16)                    # [P, E]

    def pad_w(w):  # (L, F, F) -> (L, Fp, Fp) bf16, zero-padded (exact)
        return jnp.pad(w, ((0, 0), (0, Fp - F), (0, Fp - F))).astype(jnp.bfloat16)

    def pad_b(b):  # (L, 1, F) -> (L, 1, Fp) f32
        return jnp.pad(b, ((0, 0), (0, 0), (0, Fp - F))).astype(jnp.float32)

    inputs = []
    if not disable_global:
        # Precompute the gather matrix outside the kernel (exact in bf16).
        onehot = jax.nn.one_hot(seed_index, E, dtype=jnp.bfloat16)   # [S, E]
        inputs.append(onehot)
    es_in_idx = len(inputs)
    inputs += [es_p, ps_p, ep_b, pe_b,
               pad_w(params["W_p"]), pad_b(params["b_p"]),
               pad_w(params["W_e"]), pad_b(params["b_e"])]
    if not disable_global:
        inputs += [pad_w(params["W_g"]), pad_b(params["b_g"])]

    out_shapes = (jax.ShapeDtypeStruct((E, Fp), jnp.float32),
                  jax.ShapeDtypeStruct((P, Fp), jnp.float32))

    # Explicit VMEM budget with headroom (clamped to the smallest physical
    # VMEM across generations, 64 MiB on v7x).
    operand_bytes = sum(int(x.size) * x.dtype.itemsize for x in inputs)
    operand_bytes += sum(math.prod(s.shape) * 4 for s in out_shapes)
    vmem_limit = min(64 * 1024 * 1024,
                     max(32 * 1024 * 1024, 4 * operand_bytes + (2 << 20)))

    kernel = functools.partial(_boot_gcn_kernel,
                               num_layers=L,
                               disable_global=disable_global)
    vmem_spec = pl.BlockSpec(memory_space=pltpu.MemorySpace.VMEM)

    es_out, ps_out = pl.pallas_call(
        kernel,
        out_shape=out_shapes,
        in_specs=[vmem_spec] * len(inputs),
        out_specs=(vmem_spec, vmem_spec),
        # es/ps outputs reuse the padded input HBM buffers.
        input_output_aliases={es_in_idx: 0, es_in_idx + 1: 1},
        compiler_params=pltpu.CompilerParams(vmem_limit_bytes=vmem_limit),
    )(*inputs)

    return es_out[:, :F], ps_out[:, :F]


# ----------------------------------------------------------------------------
# Pure-JAX f32 reference (for a correctness sanity check)
# ----------------------------------------------------------------------------
def boot_gcn_reference(params, opt, seed_index, es, ps, ep_adj, pe_adj):
    for l in range(int(opt["layer"])):
        seeds = es[seed_index]
        ps = jax.nn.relu(pe_adj @ es @ params["W_p"][l] + params["b_p"][l])
        es = jax.nn.relu(ep_adj @ ps @ params["W_e"][l] + params["b_e"][l])
        if not opt["disable_global"]:
            g_all = jax.nn.relu(seeds @ params["W_g"][l] + params["b_g"][l])
            es = es + jnp.mean(g_all, axis=0, keepdims=True)
    return es, ps


# ----------------------------------------------------------------------------
# Parameter initialization (deterministic, stacked across layers)
# ----------------------------------------------------------------------------
def xavier_uniform(key, shape):
    fan_out, fan_in = shape[-2], shape[-1]
    bound = (6.0 / (fan_in + fan_out)) ** 0.5
    return jax.random.uniform(key, shape, jnp.float32, -bound, bound)


def init_params(key, opt):
    F = opt["num_feature"]
    L = opt["layer"]
    k1, k2, k3 = jax.random.split(key, 3)
    return {
        "W_p": xavier_uniform(k1, (L, F, F)),
        "b_p": jnp.zeros((L, 1, F), jnp.float32),
        "W_e": xavier_uniform(k2, (L, F, F)),
        "b_e": jnp.zeros((L, 1, F), jnp.float32),
        "W_g": xavier_uniform(k3, (L, F, F)),
        "b_g": jnp.zeros((L, 1, F), jnp.float32),
    }


# ----------------------------------------------------------------------------
# Demo
# ----------------------------------------------------------------------------
if __name__ == "__main__":
    base_opt = {
        "num_feature": 32,
        "num_class": 8,
        "dropout": 0.0,          # identity -> no op needed
        "layer": 2,
        "seed_count": 2,
        "sparse": False,         # dense adjacency matmul path
        "disable_global": False,
    }

    E, P, F = 32, 16, base_opt["num_feature"]
    seed_total = base_opt["seed_count"] * base_opt["num_class"]   # 16

    key = jax.random.PRNGKey(0)
    key, k_es, k_ps, k_ep, k_pe, k_idx, k_par = jax.random.split(key, 7)

    es = jax.random.normal(k_es, (E, F), jnp.float32)
    ps = jax.random.normal(k_ps, (P, F), jnp.float32)
    # simple dense bipartite adjacencies (row-normalized 0/1)
    ep_adj = (jax.random.uniform(k_ep, (E, P)) < 0.3).astype(jnp.float32)
    ep_adj = ep_adj / jnp.maximum(ep_adj.sum(1, keepdims=True), 1.0)
    pe_adj = (jax.random.uniform(k_pe, (P, E)) < 0.3).astype(jnp.float32)
    pe_adj = pe_adj / jnp.maximum(pe_adj.sum(1, keepdims=True), 1.0)
    seed_index = jax.random.randint(k_idx, (seed_total,), 0, E)

    params = init_params(k_par, base_opt)

    # Looser tolerance vs the f32 reference because the kernel feeds the MXU
    # bf16 operands (f32 accumulation is kept).
    TOL = 5e-2

    for disable_global in (False, True):
        opt = dict(base_opt, disable_global=disable_global)
        fwd = jax.jit(lambda p, si, e, pr, epa, pea, o=opt:
                      boot_gcn_forward(p, o, si, e, pr, epa, pea))

        n_es, n_ps = fwd(params, seed_index, es, ps, ep_adj, pe_adj)
        jax.block_until_ready((n_es, n_ps))

        assert n_es.shape == (E, F)
        assert n_ps.shape == (P, F)

        r_es, r_ps = boot_gcn_reference(params, opt, seed_index, es, ps,
                                        ep_adj, pe_adj)
        assert jnp.allclose(n_es, r_es, rtol=TOL, atol=TOL), \
            f"es mismatch (disable_global={disable_global})"
        assert jnp.allclose(n_ps, r_ps, rtol=TOL, atol=TOL), \
            f"ps mismatch (disable_global={disable_global})"

    print("KERNEL_OK")
</pallas_src>

<mosaic_0001>
module attributes {stable_mosaic.version = 11 : i64} {
  func.func @_boot_gcn_kernel(%arg0: memref<16x32xbf16, #tpu.memory_space<vmem>>, %arg1: memref<32x128xf32, #tpu.memory_space<vmem>>, %arg2: memref<16x128xf32, #tpu.memory_space<vmem>>, %arg3: memref<32x16xbf16, #tpu.memory_space<vmem>>, %arg4: memref<16x32xbf16, #tpu.memory_space<vmem>>, %arg5: memref<2x128x128xbf16, #tpu.memory_space<vmem>>, %arg6: memref<2x1x128xf32, #tpu.memory_space<vmem>>, %arg7: memref<2x128x128xbf16, #tpu.memory_space<vmem>>, %arg8: memref<2x1x128xf32, #tpu.memory_space<vmem>>, %arg9: memref<2x128x128xbf16, #tpu.memory_space<vmem>>, %arg10: memref<2x1x128xf32, #tpu.memory_space<vmem>>, %arg11: memref<32x128xf32, #tpu.memory_space<vmem>>, %arg12: memref<16x128xf32, #tpu.memory_space<vmem>>) attributes {dimension_semantics = [], scalar_prefetch = 0 : i64, scratch_operands = 0 : i64, tpu.core_type = #tpu.core_type<tc>} {
    %c0 = arith.constant 0 : index
    %c0_0 = arith.constant 0 : index
    %0 = vector.load %arg0[%c0, %c0_0] : memref<16x32xbf16, #tpu.memory_space<vmem>>, vector<16x32xbf16>
    %c0_1 = arith.constant 0 : index
    %c0_2 = arith.constant 0 : index
    %1 = vector.load %arg1[%c0_1, %c0_2] : memref<32x128xf32, #tpu.memory_space<vmem>>, vector<32x128xf32>
    %c0_3 = arith.constant 0 : index
    %c0_4 = arith.constant 0 : index
    %2 = vector.load %arg3[%c0_3, %c0_4] : memref<32x16xbf16, #tpu.memory_space<vmem>>, vector<32x16xbf16>
    %c0_5 = arith.constant 0 : index
    %c0_6 = arith.constant 0 : index
    %3 = vector.load %arg4[%c0_5, %c0_6] : memref<16x32xbf16, #tpu.memory_space<vmem>>, vector<16x32xbf16>
    %4 = arith.truncf %1 : vector<32x128xf32> to vector<32x128xbf16>
    %cst = arith.constant dense<0.000000e+00> : vector<16x128xf32>
    %5 = tpu.matmul %0, %4, %cst {dimension_numbers = #tpu.dot_dimension_numbers<[1], [0], [0], [1], [0, 0, 1, 1], [], []>} : vector<16x32xbf16>, vector<32x128xbf16>, vector<16x128xf32> -> vector<16x128xf32>
    %cst_7 = arith.constant dense<0.000000e+00> : vector<16x128xf32>
    %6 = tpu.matmul %3, %4, %cst_7 {dimension_numbers = #tpu.dot_dimension_numbers<[1], [0], [0], [1], [0, 0, 1, 1], [], []>} : vector<16x32xbf16>, vector<32x128xbf16>, vector<16x128xf32> -> vector<16x128xf32>
    %7 = arith.truncf %6 : vector<16x128xf32> to vector<16x128xbf16>
    %c0_8 = arith.constant 0 : index
    %c0_9 = arith.constant 0 : index
    %c0_10 = arith.constant 0 : index
    %8 = vector.load %arg5[%c0_8, %c0_9, %c0_10] : memref<2x128x128xbf16, #tpu.memory_space<vmem>>, vector<1x128x128xbf16>
    %9 = vector.shape_cast %8 : vector<1x128x128xbf16> to vector<128x128xbf16>
    %cst_11 = arith.constant dense<0.000000e+00> : vector<16x128xf32>
    %10 = tpu.matmul %7, %9, %cst_11 {dimension_numbers = #tpu.dot_dimension_numbers<[1], [0], [0], [1], [0, 0, 1, 1], [], []>} : vector<16x128xbf16>, vector<128x128xbf16>, vector<16x128xf32> -> vector<16x128xf32>
    %c0_12 = arith.constant 0 : index
    %c0_13 = arith.constant 0 : index
    %c0_14 = arith.constant 0 : index
    %11 = vector.load %arg6[%c0_12, %c0_13, %c0_14] : memref<2x1x128xf32, #tpu.memory_space<vmem>>, vector<1x1x128xf32>
    %12 = vector.shape_cast %11 : vector<1x1x128xf32> to vector<1x128xf32>
    %13 = vector.broadcast %12 : vector<1x128xf32> to vector<16x128xf32>
    %14 = arith.addf %10, %13 : vector<16x128xf32>
    %cst_15 = arith.constant 0.000000e+00 : f32
    %15 = vector.broadcast %cst_15 : f32 to vector<16x128xf32>
    %16 = arith.maximumf %14, %15 : vector<16x128xf32>
    %17 = arith.truncf %16 : vector<16x128xf32> to vector<16x128xbf16>
    %cst_16 = arith.constant dense<0.000000e+00> : vector<32x128xf32>
    %18 = tpu.matmul %2, %17, %cst_16 {dimension_numbers = #tpu.dot_dimension_numbers<[1], [0], [0], [1], [0, 0, 1, 1], [], []>} : vector<32x16xbf16>, vector<16x128xbf16>, vector<32x128xf32> -> vector<32x128xf32>
    %19 = arith.truncf %18 : vector<32x128xf32> to vector<32x128xbf16>
    %c0_17 = arith.constant 0 : index
    %c0_18 = arith.constant 0 : index
    %c0_19 = arith.constant 0 : index
    %20 = vector.load %arg7[%c0_17, %c0_18, %c0_19] : memref<2x128x128xbf16, #tpu.memory_space<vmem>>, vector<1x128x128xbf16>
    %21 = vector.shape_cast %20 : vector<1x128x128xbf16> to vector<128x128xbf16>
    %cst_20 = arith.constant dense<0.000000e+00> : vector<32x128xf32>
    %22 = tpu.matmul %19, %21, %cst_20 {dimension_numbers = #tpu.dot_dimension_numbers<[1], [0], [0], [1], [0, 0, 1, 1], [], []>} : vector<32x128xbf16>, vector<128x128xbf16>, vector<32x128xf32> -> vector<32x128xf32>
    %c0_21 = arith.constant 0 : index
    %c0_22 = arith.constant 0 : index
    %c0_23 = arith.constant 0 : index
    %23 = vector.load %arg8[%c0_21, %c0_22, %c0_23] : memref<2x1x128xf32, #tpu.memory_space<vmem>>, vector<1x1x128xf32>
    %24 = vector.shape_cast %23 : vector<1x1x128xf32> to vector<1x128xf32>
    %25 = vector.broadcast %24 : vector<1x128xf32> to vector<32x128xf32>
    %26 = arith.addf %22, %25 : vector<32x128xf32>
    %cst_24 = arith.constant 0.000000e+00 : f32
    %27 = vector.broadcast %cst_24 : f32 to vector<32x128xf32>
    %28 = arith.maximumf %26, %27 : vector<32x128xf32>
    %29 = arith.truncf %5 : vector<16x128xf32> to vector<16x128xbf16>
    %c0_25 = arith.constant 0 : index
    %c0_26 = arith.constant 0 : index
    %c0_27 = arith.constant 0 : index
    %30 = vector.load %arg9[%c0_25, %c0_26, %c0_27] : memref<2x128x128xbf16, #tpu.memory_space<vmem>>, vector<1x128x128xbf16>
    %31 = vector.shape_cast %30 : vector<1x128x128xbf16> to vector<128x128xbf16>
    %cst_28 = arith.constant dense<0.000000e+00> : vector<16x128xf32>
    %32 = tpu.matmul %29, %31, %cst_28 {dimension_numbers = #tpu.dot_dimension_numbers<[1], [0], [0], [1], [0, 0, 1, 1], [], []>} : vector<16x128xbf16>, vector<128x128xbf16>, vector<16x128xf32> -> vector<16x128xf32>
    %c0_29 = arith.constant 0 : index
    %c0_30 = arith.constant 0 : index
    %c0_31 = arith.constant 0 : index
    %33 = vector.load %arg10[%c0_29, %c0_30, %c0_31] : memref<2x1x128xf32, #tpu.memory_space<vmem>>, vector<1x1x128xf32>
    %34 = vector.shape_cast %33 : vector<1x1x128xf32> to vector<1x128xf32>
    %35 = vector.broadcast %34 : vector<1x128xf32> to vector<16x128xf32>
    %36 = arith.addf %32, %35 : vector<16x128xf32>
    %cst_32 = arith.constant 0.000000e+00 : f32
    %37 = vector.broadcast %cst_32 : f32 to vector<16x128xf32>
    %38 = arith.maximumf %36, %37 : vector<16x128xf32>
    %cst_33 = arith.constant dense<0.000000e+00> : vector<128xf32>
    %39 = vector.multi_reduction <add>, %38, %cst_33 [0] : vector<16x128xf32> to vector<128xf32>
    %40 = vector.shape_cast %39 : vector<128xf32> to vector<1x128xf32>
    %cst_34 = arith.constant 1.600000e+01 : f32
    %41 = vector.broadcast %cst_34 : f32 to vector<1x128xf32>
    %42 = arith.divf %40, %41 : vector<1x128xf32>
    %43 = vector.broadcast %42 : vector<1x128xf32> to vector<32x128xf32>
    %44 = arith.addf %28, %43 : vector<32x128xf32>
    %45 = arith.truncf %44 : vector<32x128xf32> to vector<32x128xbf16>
    %cst_35 = arith.constant dense<0.000000e+00> : vector<16x128xf32>
    %46 = tpu.matmul %0, %45, %cst_35 {dimension_numbers = #tpu.dot_dimension_numbers<[1], [0], [0], [1], [0, 0, 1, 1], [], []>} : vector<16x32xbf16>, vector<32x128xbf16>, vector<16x128xf32> -> vector<16x128xf32>
    %cst_36 = arith.constant dense<0.000000e+00> : vector<16x128xf32>
    %47 = tpu.matmul %3, %45, %cst_36 {dimension_numbers = #tpu.dot_dimension_numbers<[1], [0], [0], [1], [0, 0, 1, 1], [], []>} : vector<16x32xbf16>, vector<32x128xbf16>, vector<16x128xf32> -> vector<16x128xf32>
    %48 = arith.truncf %47 : vector<16x128xf32> to vector<16x128xbf16>
    %c1 = arith.constant 1 : index
    %c0_37 = arith.constant 0 : index
    %c0_38 = arith.constant 0 : index
    %49 = vector.load %arg5[%c1, %c0_37, %c0_38] : memref<2x128x128xbf16, #tpu.memory_space<vmem>>, vector<1x128x128xbf16>
    %50 = vector.shape_cast %49 : vector<1x128x128xbf16> to vector<128x128xbf16>
    %cst_39 = arith.constant dense<0.000000e+00> : vector<16x128xf32>
    %51 = tpu.matmul %48, %50, %cst_39 {dimension_numbers = #tpu.dot_dimension_numbers<[1], [0], [0], [1], [0, 0, 1, 1], [], []>} : vector<16x128xbf16>, vector<128x128xbf16>, vector<16x128xf32> -> vector<16x128xf32>
    %c1_40 = arith.constant 1 : index
    %c0_41 = arith.constant 0 : index
    %c0_42 = arith.constant 0 : index
    %52 = vector.load %arg6[%c1_40, %c0_41, %c0_42] : memref<2x1x128xf32, #tpu.memory_space<vmem>>, vector<1x1x128xf32>
    %53 = vector.shape_cast %52 : vector<1x1x128xf32> to vector<1x128xf32>
    %54 = vector.broadcast %53 : vector<1x128xf32> to vector<16x128xf32>
    %55 = arith.addf %51, %54 : vector<16x128xf32>
    %cst_43 = arith.constant 0.000000e+00 : f32
    %56 = vector.broadcast %cst_43 : f32 to vector<16x128xf32>
    %57 = arith.maximumf %55, %56 : vector<16x128xf32>
    %58 = arith.truncf %57 : vector<16x128xf32> to vector<16x128xbf16>
    %cst_44 = arith.constant dense<0.000000e+00> : vector<32x128xf32>
    %59 = tpu.matmul %2, %58, %cst_44 {dimension_numbers = #tpu.dot_dimension_numbers<[1], [0], [0], [1], [0, 0, 1, 1], [], []>} : vector<32x16xbf16>, vector<16x128xbf16>, vector<32x128xf32> -> vector<32x128xf32>
    %60 = arith.truncf %59 : vector<32x128xf32> to vector<32x128xbf16>
    %c1_45 = arith.constant 1 : index
    %c0_46 = arith.constant 0 : index
    %c0_47 = arith.constant 0 : index
    %61 = vector.load %arg7[%c1_45, %c0_46, %c0_47] : memref<2x128x128xbf16, #tpu.memory_space<vmem>>, vector<1x128x128xbf16>
    %62 = vector.shape_cast %61 : vector<1x128x128xbf16> to vector<128x128xbf16>
    %cst_48 = arith.constant dense<0.000000e+00> : vector<32x128xf32>
    %63 = tpu.matmul %60, %62, %cst_48 {dimension_numbers = #tpu.dot_dimension_numbers<[1], [0], [0], [1], [0, 0, 1, 1], [], []>} : vector<32x128xbf16>, vector<128x128xbf16>, vector<32x128xf32> -> vector<32x128xf32>
    %c1_49 = arith.constant 1 : index
    %c0_50 = arith.constant 0 : index
    %c0_51 = arith.constant 0 : index
    %64 = vector.load %arg8[%c1_49, %c0_50, %c0_51] : memref<2x1x128xf32, #tpu.memory_space<vmem>>, vector<1x1x128xf32>
    %65 = vector.shape_cast %64 : vector<1x1x128xf32> to vector<1x128xf32>
    %66 = vector.broadcast %65 : vector<1x128xf32> to vector<32x128xf32>
    %67 = arith.addf %63, %66 : vector<32x128xf32>
    %cst_52 = arith.constant 0.000000e+00 : f32
    %68 = vector.broadcast %cst_52 : f32 to vector<32x128xf32>
    %69 = arith.maximumf %67, %68 : vector<32x128xf32>
    %70 = arith.truncf %46 : vector<16x128xf32> to vector<16x128xbf16>
    %c1_53 = arith.constant 1 : index
    %c0_54 = arith.constant 0 : index
    %c0_55 = arith.constant 0 : index
    %71 = vector.load %arg9[%c1_53, %c0_54, %c0_55] : memref<2x128x128xbf16, #tpu.memory_space<vmem>>, vector<1x128x128xbf16>
    %72 = vector.shape_cast %71 : vector<1x128x128xbf16> to vector<128x128xbf16>
    %cst_56 = arith.constant dense<0.000000e+00> : vector<16x128xf32>
    %73 = tpu.matmul %70, %72, %cst_56 {dimension_numbers = #tpu.dot_dimension_numbers<[1], [0], [0], [1], [0, 0, 1, 1], [], []>} : vector<16x128xbf16>, vector<128x128xbf16>, vector<16x128xf32> -> vector<16x128xf32>
    %c1_57 = arith.constant 1 : index
    %c0_58 = arith.constant 0 : index
    %c0_59 = arith.constant 0 : index
    %74 = vector.load %arg10[%c1_57, %c0_58, %c0_59] : memref<2x1x128xf32, #tpu.memory_space<vmem>>, vector<1x1x128xf32>
    %75 = vector.shape_cast %74 : vector<1x1x128xf32> to vector<1x128xf32>
    %76 = vector.broadcast %75 : vector<1x128xf32> to vector<16x128xf32>
    %77 = arith.addf %73, %76 : vector<16x128xf32>
    %cst_60 = arith.constant 0.000000e+00 : f32
    %78 = vector.broadcast %cst_60 : f32 to vector<16x128xf32>
    %79 = arith.maximumf %77, %78 : vector<16x128xf32>
    %cst_61 = arith.constant dense<0.000000e+00> : vector<128xf32>
    %80 = vector.multi_reduction <add>, %79, %cst_61 [0] : vector<16x128xf32> to vector<128xf32>
    %81 = vector.shape_cast %80 : vector<128xf32> to vector<1x128xf32>
    %cst_62 = arith.constant 1.600000e+01 : f32
    %82 = vector.broadcast %cst_62 : f32 to vector<1x128xf32>
    %83 = arith.divf %81, %82 : vector<1x128xf32>
    %84 = vector.broadcast %83 : vector<1x128xf32> to vector<32x128xf32>
    %85 = arith.addf %69, %84 : vector<32x128xf32>
    %c0_63 = arith.constant 0 : index
    %c0_64 = arith.constant 0 : index
    %86 = vector.load %arg11[%c0_63, %c0_64] : memref<32x128xf32, #tpu.memory_space<vmem>>, vector<32x128xf32>
    tpu.vector_store %arg11[%c0_63, %c0_64], %85 {strides = array<i32>} : memref<32x128xf32, #tpu.memory_space<vmem>>, vector<32x128xf32>,
    %c0_65 = arith.constant 0 : index
    %c0_66 = arith.constant 0 : index
    %87 = vector.load %arg12[%c0_65, %c0_66] : memref<16x128xf32, #tpu.memory_space<vmem>>, vector<16x128xf32>
    tpu.vector_store %arg12[%c0_65, %c0_66], %57 {strides = array<i32>} : memref<16x128xf32, #tpu.memory_space<vmem>>, vector<16x128xf32>,
    return
  }
}

</mosaic_0001>

<llo_original>
// kernel: _lambda_.1
$region0: #{_lambda_.1}
  #allocation0 [shape = 'u32[]', space=smem, size = 0x4, offset = 0x4, fixed_abs, tag = 'smem constant byte address 0x4 - core index']
  #allocation1 [shape = 'u32[144,128]{1,0:T(1,128)}', space=vmem, size = 0x12000, scoped, tag = 'internal scratch']
  %s0 = inlined_call_operand.vmem [shape: bf16[16,32], index: 0, kind: input, shape index: {}]
  %s1 = inlined_call_operand.vmem [shape: f32[32,128], index: 1, kind: input, shape index: {}, may-alias: {1,11}]
  %s2 = inlined_call_operand.vmem [shape: f32[16,128], index: 2, kind: input, shape index: {}, may-alias: {2,12}]
  %s3 = inlined_call_operand.vmem [shape: bf16[32,16], index: 3, kind: input, shape index: {}]
  %s4 = inlined_call_operand.vmem [shape: bf16[16,32], index: 4, kind: input, shape index: {}]
  %s5 = inlined_call_operand.vmem [shape: bf16[2,128,128], index: 5, kind: input, shape index: {}]
  %s6 = inlined_call_operand.vmem [shape: f32[2,1,128], index: 6, kind: input, shape index: {}]
  %s7 = inlined_call_operand.vmem [shape: bf16[2,128,128], index: 7, kind: input, shape index: {}]
  %s8 = inlined_call_operand.vmem [shape: f32[2,1,128], index: 8, kind: input, shape index: {}]
  %s9 = inlined_call_operand.vmem [shape: bf16[2,128,128], index: 9, kind: input, shape index: {}]
  %s10 = inlined_call_operand.vmem [shape: f32[2,1,128], index: 10, kind: input, shape index: {}]
  %s11 = inlined_call_operand.vmem [shape: f32[32,128], index: 11, kind: output, shape index: {0}, may-alias: {1,11}]
  %s12 = inlined_call_operand.vmem [shape: f32[16,128], index: 12, kind: output, shape index: {1}, may-alias: {2,12}]
  %13 = xla_tuple %s11, %s12
  %s14 = sld [smem:[#allocation0]]
  $region62: #{_lambda_.1} parent=0
    _
  %s16 = ssub.s32 1, %s14
  %s17 = scalar_select 0, %s16, %s14
  // Predicated region
  $region2: #{_lambda_.1} parent=0 // pred_check
    _
  $region3: #{_lambda_.1} parent=0 // pred_check_branch
    %19 = sbr.rel (0) target = $region5
  $region4: #{_lambda_.1} parent=0 // pred_region
    _
  $region5: #{_lambda_.1} parent=0 // pred_fallthru
    _
  // Predicated region
  $region6: #{_lambda_.1} parent=0 // pred_check
    _
  $region7: #{_lambda_.1} parent=0 // pred_check_branch
    %21 = sbr.rel (0) target = $region9
  $region8: #{_lambda_.1} parent=0 // pred_region
    _
  $region9: #{_lambda_.1} parent=0 // pred_fallthru
    _
  // Predicated region
  $region10: #{_lambda_.1} parent=0 // pred_check
    _
  $region11: #{_lambda_.1} parent=0 // pred_check_branch
    %23 = sbr.rel (0) target = $region13
  $region12: #{_lambda_.1} parent=0 // pred_region
    _
  $region13: #{_lambda_.1} parent=0 // pred_fallthru
    _
  // Predicated region
  $region14: #{_lambda_.1} parent=0 // pred_check
    _
  $region15: #{_lambda_.1} parent=0 // pred_check_branch
    %25 = sbr.rel (0) target = $region17
  $region16: #{_lambda_.1} parent=0 // pred_region
    _
  $region17: #{_lambda_.1} parent=0 // pred_fallthru
    _
  // Predicated region
  $region18: #{_lambda_.1} parent=0 // pred_check
    _
  $region19: #{_lambda_.1} parent=0 // pred_check_branch
    %27 = sbr.rel (0) target = $region21
  $region20: #{_lambda_.1} parent=0 // pred_region
    _
  $region21: #{_lambda_.1} parent=0 // pred_fallthru
    _
  // Predicated region
  $region22: #{_lambda_.1} parent=0 // pred_check
    _
  $region23: #{_lambda_.1} parent=0 // pred_check_branch
    %29 = sbr.rel (0) target = $region25
  $region24: #{_lambda_.1} parent=0 // pred_region
    _
  $region25: #{_lambda_.1} parent=0 // pred_fallthru
    _
  // Predicated region
  $region26: #{_lambda_.1} parent=0 // pred_check
    _
  $region27: #{_lambda_.1} parent=0 // pred_check_branch
    %31 = sbr.rel (0) target = $region29
  $region28: #{_lambda_.1} parent=0 // pred_region
    _
  $region29: #{_lambda_.1} parent=0 // pred_fallthru
    _
  // Predicated region
  $region30: #{_lambda_.1} parent=0 // pred_check
    _
  $region31: #{_lambda_.1} parent=0 // pred_check_branch
    %33 = sbr.rel (0) target = $region33
  $region32: #{_lambda_.1} parent=0 // pred_region
    _
  $region33: #{_lambda_.1} parent=0 // pred_fallthru
    _
  // Predicated region
  $region34: #{_lambda_.1} parent=0 // pred_check
    _
  $region35: #{_lambda_.1} parent=0 // pred_check_branch
    %35 = sbr.rel (0) target = $region37
  $region36: #{_lambda_.1} parent=0 // pred_region
    _
  $region37: #{_lambda_.1} parent=0 // pred_fallthru
    _
  // Predicated region
  $region38: #{_lambda_.1} parent=0 // pred_check
    _
  $region39: #{_lambda_.1} parent=0 // pred_check_branch
    %37 = sbr.rel (0) target = $region41
  $region40: #{_lambda_.1} parent=0 // pred_region
    _
  $region41: #{_lambda_.1} parent=0 // pred_fallthru
    _
  // Predicated region
  $region42: #{_lambda_.1} parent=0 // pred_check
    _
  $region43: #{_lambda_.1} parent=0 // pred_check_branch
    %39 = sbr.rel (0) target = $region45
  $region44: #{_lambda_.1} parent=0 // pred_region
    _
  $region45: #{_lambda_.1} parent=0 // pred_fallthru
    _
  %v41 = vld [vmem:[%s0] sm:$0xf]
  %v42 = vld [vmem:[%s0 + $0x4] sm:$0xf]
  %v43 = vld [vmem:[%s1] sm:$0xff]
  %v44 = vld [vmem:[%s1 + $0x8] sm:$0xff]
  %v45 = vld [vmem:[%s1 + $0x10] sm:$0xff]
  %v46 = vld [vmem:[%s1 + $0x18] sm:$0xff]
  %v47 = vld [vmem:[%s3] sm:$0xf]
  %v48 = vld [vmem:[%s3 + $0x4] sm:$0xf]
  %v49 = vld [vmem:[%s3 + $0x8] sm:$0xf]
  %v50 = vld [vmem:[%s3 + $0xc] sm:$0xf]
  %v51 = vld [vmem:[%s4] sm:$0xf]
  %v52 = vld [vmem:[%s4 + $0x4] sm:$0xf]
  %v53 = vpack.c.bf16 %v44, %v43
  %v54 = vpack.c.bf16 %v46, %v45
  %v57 = vunpack.c.l.b16 %v41
  %v58 = vunpack.c.l.b16 %v42
  %v59 = vpack.c.b16 %v58, %v57
  %vm60 = vcmask 261120
  %v62 = vsel %vm60, %v59, 0
  %64 = vmatprep.subr.bf16.mxu0 0
  %65 = vmatpush1.bf16.msra.mxu0 0
  %66 = vmatprep.subr.bf16.mxu0 0
  %67 = vmatpush1.bf16.msra.mxu0 0
  %68 = vmatprep.subr.bf16.mxu0 0
  %69 = vmatpush1.bf16.msra.mxu0 0
  %70 = vmatprep.subr.bf16.mxu0 0
  %71 = vmatpush1.bf16.msra.mxu0 0
  %72 = vmatprep.subr.bf16.mxu0 0
  %73 = vmatpush1.bf16.msra.mxu0 0
  %74 = vmatprep.subr.bf16.mxu0 0
  %75 = vmatpush1.bf16.msra.mxu0 0
  %76 = vmatprep.subr.bf16.mxu0 0
  %77 = vmatpush1.bf16.msra.mxu0 %v54
  %78 = vmatprep.subr.bf16.mxu0 0
  %79 = vmatpush1.bf16.msra.mxu0 %v53
  %80 = vmatprep.subr.bf16.mxu0 0
  %81 = vmatpush2.bf16.msra.mxu0 0
  %82 = vmatprep.subr.bf16.mxu0 0
  %83 = vmatpush2.bf16.msra.mxu0 0
  %84 = vmatprep.subr.bf16.mxu0 0
  %85 = vmatpush2.bf16.msra.mxu0 0
  %86 = vmatprep.subr.bf16.mxu0 0
  %87 = vmatpush2.bf16.msra.mxu0 0
  %88 = vmatprep.subr.bf16.mxu0 0
  %89 = vmatpush2.bf16.msra.mxu0 0
  %90 = vmatprep.subr.bf16.mxu0 0
  %91 = vmatpush2.bf16.msra.mxu0 0
  %92 = vmatprep.subr.bf16.mxu0 0
  %93 = vmatpush2.bf16.msra.mxu0 0
  %94 = vmatprep.subr.bf16.mxu0 0
  %95 = vmatpush2.bf16.msra.mxu0 0
  %96 = vmatprep.mubr.bf16.mxu0 0
  %97 = vmatmul.mubr.bf16.gmra.mxu0 %v62
  %v98 = vpop.f32.mrf.mxu0
  %v99 = vadd.f32 0.0, %v98
  %v100 = vpop.f32.mrf.mxu0
  %v101 = vpop.f32.mrf.mxu0
  %v102 = vadd.f32 0.0, %v101
  %v103 = vpop.f32.mrf.mxu0
  %104 = vdwg.mxu0
  %v107 = vunpack.c.l.b16 %v51
  %v108 = vunpack.c.l.b16 %v52
  %v109 = vpack.c.b16 %v108, %v107
  %v111 = vsel %vm60, %v109, 0
  %113 = vmatprep.subr.bf16.mxu0 0
  %114 = vmatpush1.bf16.msra.mxu0 0
  %115 = vmatprep.subr.bf16.mxu0 0
  %116 = vmatpush1.bf16.msra.mxu0 0
  %117 = vmatprep.subr.bf16.mxu0 0
  %118 = vmatpush1.bf16.msra.mxu0 0
  %119 = vmatprep.subr.bf16.mxu0 0
  %120 = vmatpush1.bf16.msra.mxu0 0
  %121 = vmatprep.subr.bf16.mxu0 0
  %122 = vmatpush1.bf16.msra.mxu0 0
  %123 = vmatprep.subr.bf16.mxu0 0
  %124 = vmatpush1.bf16.msra.mxu0 0
  %125 = vmatprep.subr.bf16.mxu0 0
  %126 = vmatpush1.bf16.msra.mxu0 %v54
  %127 = vmatprep.subr.bf16.mxu0 0
  %128 = vmatpush1.bf16.msra.mxu0 %v53
  %129 = vmatprep.subr.bf16.mxu0 0
  %130 = vmatpush2.bf16.msra.mxu0 0
  %131 = vmatprep.subr.bf16.mxu0 0
  %132 = vmatpush2.bf16.msra.mxu0 0
  %133 = vmatprep.subr.bf16.mxu0 0
  %134 = vmatpush2.bf16.msra.mxu0 0
  %135 = vmatprep.subr.bf16.mxu0 0
  %136 = vmatpush2.bf16.msra.mxu0 0
  %137 = vmatprep.subr.bf16.mxu0 0
  %138 = vmatpush2.bf16.msra.mxu0 0
  %139 = vmatprep.subr.bf16.mxu0 0
  %140 = vmatpush2.bf16.msra.mxu0 0
  %141 = vmatprep.subr.bf16.mxu0 0
  %142 = vmatpush2.bf16.msra.mxu0 0
  %143 = vmatprep.subr.bf16.mxu0 0
  %144 = vmatpush2.bf16.msra.mxu0 0
  %145 = vmatprep.mubr.bf16.mxu0 0
  %146 = vmatmul.mubr.bf16.gmra.mxu0 %v111
  %v147 = vpop.f32.mrf.mxu0
  %v148 = vadd.f32 0.0, %v147
  %v149 = vpop.f32.mrf.mxu0
  %v150 = vpop.f32.mrf.mxu0
  %v151 = vadd.f32 0.0, %v150
  %v152 = vpop.f32.mrf.mxu0
  %153 = vdwg.mxu0
  %v154 = vpack.c.bf16 %v151, %v148
  %v155 = vld [vmem:[%s5] sm:$0xf]
  %v156 = vld [vmem:[%s5 + $0x4] sm:$0xf]
  %v157 = vld [vmem:[%s5 + $0x8] sm:$0xf]
  %v158 = vld [vmem:[%s5 + $0xc] sm:$0xf]
  %v159 = vld [vmem:[%s5 + $0x10] sm:$0xf]
  %v160 = vld [vmem:[%s5 + $0x14] sm:$0xf]
  %v161 = vld [vmem:[%s5 + $0x18] sm:$0xf]
  %v162 = vld [vmem:[%s5 + $0x1c] sm:$0xf]
  %v163 = vld [vmem:[%s5 + $0x20] sm:$0xf]
  %v164 = vld [vmem:[%s5 + $0x24] sm:$0xf]
  %v165 = vld [vmem:[%s5 + $0x28] sm:$0xf]
  %v166 = vld [vmem:[%s5 + $0x2c] sm:$0xf]
  %v167 = vld [vmem:[%s5 + $0x30] sm:$0xf]
  %v168 = vld [vmem:[%s5 + $0x34] sm:$0xf]
  %v169 = vld [vmem:[%s5 + $0x38] sm:$0xf]
  %v170 = vld [vmem:[%s5 + $0x3c] sm:$0xf]
  %v171 = vld [vmem:[%s6] sm:$0x1]
  %v173 = vlaneseq
  %v174 = vshrl.u32 %v173, 7
  %v175 = vsub.s32 0, %v174
  %v176 = vrot.slane %v171, %v175
  %v194 = vunpack.c.l.b16 %v155
  %v195 = vunpack.c.l.b16 %v156
  %v196 = vunpack.c.l.b16 %v157
  %v197 = vunpack.c.l.b16 %v158
  %v198 = vunpack.c.l.b16 %v159
  %v199 = vunpack.c.l.b16 %v160
  %v200 = vunpack.c.l.b16 %v161
  %v201 = vunpack.c.l.b16 %v162
  %v202 = vunpack.c.l.b16 %v163
  %v203 = vunpack.c.l.b16 %v164
  %v204 = vunpack.c.l.b16 %v165
  %v205 = vunpack.c.l.b16 %v166
  %v206 = vunpack.c.l.b16 %v167
  %v207 = vunpack.c.l.b16 %v168
  %v208 = vunpack.c.l.b16 %v169
  %v209 = vunpack.c.l.b16 %v170
  %v210 = vpack.c.b16 %v195, %v194
  %v211 = vpack.c.b16 %v197, %v196
  %v212 = vpack.c.b16 %v199, %v198
  %v213 = vpack.c.b16 %v201, %v200
  %v214 = vpack.c.b16 %v203, %v202
  %v215 = vpack.c.b16 %v205, %v204
  %v216 = vpack.c.b16 %v207, %v206
  %v217 = vpack.c.b16 %v209, %v208
  %226 = vmatprep.subr.bf16.mxu0 0
  %227 = vmatpush1.bf16.msra.mxu0 %v217
  %228 = vmatprep.subr.bf16.mxu0 0
  %229 = vmatpush1.bf16.msra.mxu0 %v216
  %230 = vmatprep.subr.bf16.mxu0 0
  %231 = vmatpush1.bf16.msra.mxu0 %v215
  %232 = vmatprep.subr.bf16.mxu0 0
  %233 = vmatpush1.bf16.msra.mxu0 %v214
  %234 = vmatprep.subr.bf16.mxu0 0
  %235 = vmatpush1.bf16.msra.mxu0 %v213
  %236 = vmatprep.subr.bf16.mxu0 0
  %237 = vmatpush1.bf16.msra.mxu0 %v212
  %238 = vmatprep.subr.bf16.mxu0 0
  %239 = vmatpush1.bf16.msra.mxu0 %v211
  %240 = vmatprep.subr.bf16.mxu0 0
  %241 = vmatpush1.bf16.msra.mxu0 %v210
  %242 = vmatprep.subr.bf16.mxu0 0
  %243 = vmatpush2.bf16.msra.mxu0 0
  %244 = vmatprep.subr.bf16.mxu0 0
  %245 = vmatpush2.bf16.msra.mxu0 0
  %246 = vmatprep.subr.bf16.mxu0 0
  %247 = vmatpush2.bf16.msra.mxu0 0
  %248 = vmatprep.subr.bf16.mxu0 0
  %249 = vmatpush2.bf16.msra.mxu0 0
  %250 = vmatprep.subr.bf16.mxu0 0
  %251 = vmatpush2.bf16.msra.mxu0 0
  %252 = vmatprep.subr.bf16.mxu0 0
  %253 = vmatpush2.bf16.msra.mxu0 0
  %254 = vmatprep.subr.bf16.mxu0 0
  %255 = vmatpush2.bf16.msra.mxu0 0
  %256 = vmatprep.subr.bf16.mxu0 0
  %257 = vmatpush2.bf16.msra.mxu0 0
  %258 = vmatprep.mubr.bf16.mxu0 0
  %259 = vmatmul.mubr.bf16.gmra.mxu0 %v154
  %v260 = vpop.f32.mrf.mxu0
  %v261 = vadd.f32 %v176, %v260
  %v262 = vpop.f32.mrf.mxu0
  %v263 = vpop.f32.mrf.mxu0
  %v264 = vadd.f32 %v176, %v263
  %v265 = vpop.f32.mrf.mxu0
  %266 = vdwg.mxu0
  %v267 = vmax.f32 %v261, 0.0
  %v268 = vmax.f32 %v264, 0.0
  %v269 = vpack.c.bf16 %v268, %v267
  %v274 = vunpack.c.l.b16 %v47
  %v275 = vunpack.c.l.b16 %v48
  %v276 = vunpack.c.l.b16 %v49
  %v277 = vunpack.c.l.b16 %v50
  %v278 = vpack.c.b16 %v275, %v274
  %v279 = vpack.c.b16 %v277, %v276
  %vm280 = vcmask 130048
  %v282 = vsel %vm280, %v278, 0
  %v285 = vsel %vm280, %v279, 0
  %287 = vmatprep.subr.bf16.mxu0 0
  %288 = vmatpush1.bf16.msra.mxu0 0
  %289 = vmatprep.subr.bf16.mxu0 0
  %290 = vmatpush1.bf16.msra.mxu0 0
  %291 = vmatprep.subr.bf16.mxu0 0
  %292 = vmatpush1.bf16.msra.mxu0 0
  %293 = vmatprep.subr.bf16.mxu0 0
  %294 = vmatpush1.bf16.msra.mxu0 0
  %295 = vmatprep.subr.bf16.mxu0 0
  %296 = vmatpush1.bf16.msra.mxu0 0
  %297 = vmatprep.subr.bf16.mxu0 0
  %298 = vmatpush1.bf16.msra.mxu0 0
  %299 = vmatprep.subr.bf16.mxu0 0
  %300 = vmatpush1.bf16.msra.mxu0 0
  %301 = vmatprep.subr.bf16.mxu0 0
  %302 = vmatpush1.bf16.msra.mxu0 %v269
  %303 = vmatprep.subr.bf16.mxu0 0
  %304 = vmatpush2.bf16.msra.mxu0 0
  %305 = vmatprep.subr.bf16.mxu0 0
  %306 = vmatpush2.bf16.msra.mxu0 0
  %307 = vmatprep.subr.bf16.mxu0 0
  %308 = vmatpush2.bf16.msra.mxu0 0
  %309 = vmatprep.subr.bf16.mxu0 0
  %310 = vmatpush2.bf16.msra.mxu0 0
  %311 = vmatprep.subr.bf16.mxu0 0
  %312 = vmatpush2.bf16.msra.mxu0 0
  %313 = vmatprep.subr.bf16.mxu0 0
  %314 = vmatpush2.bf16.msra.mxu0 0
  %315 = vmatprep.subr.bf16.mxu0 0
  %316 = vmatpush2.bf16.msra.mxu0 0
  %317 = vmatprep.subr.bf16.mxu0 0
  %318 = vmatpush2.bf16.msra.mxu0 0
  %319 = vmatprep.mubr.bf16.mxu0 0
  %320 = vmatmul.mubr.bf16.gmra.mxu0 %v282
  %v321 = vpop.f32.mrf.mxu0
  %v322 = vadd.f32 0.0, %v321
  %v323 = vpop.f32.mrf.mxu0
  %v324 = vpop.f32.mrf.mxu0
  %v325 = vadd.f32 0.0, %v324
  %v326 = vpop.f32.mrf.mxu0
  %327 = vmatprep.mubr.bf16.mxu0 0
  %328 = vmatmul.mubr.bf16.gmra.mxu0 %v285
  %v329 = vpop.f32.mrf.mxu0
  %v330 = vadd.f32 0.0, %v329
  %v331 = vpop.f32.mrf.mxu0
  %v332 = vpop.f32.mrf.mxu0
  %v333 = vadd.f32 0.0, %v332
  %v334 = vpop.f32.mrf.mxu0
  %335 = vdwg.mxu0
  %v336 = vpack.c.bf16 %v325, %v322
  %v337 = vpack.c.bf16 %v333, %v330
  %v338 = vld [vmem:[%s7] sm:$0xf]
  %v339 = vld [vmem:[%s7 + $0x4] sm:$0xf]
  %v340 = vld [vmem:[%s7 + $0x8] sm:$0xf]
  %v341 = vld [vmem:[%s7 + $0xc] sm:$0xf]
  %v342 = vld [vmem:[%s7 + $0x10] sm:$0xf]
  %v343 = vld [vmem:[%s7 + $0x14] sm:$0xf]
  %v344 = vld [vmem:[%s7 + $0x18] sm:$0xf]
  %v345 = vld [vmem:[%s7 + $0x1c] sm:$0xf]
  %v346 = vld [vmem:[%s7 + $0x20] sm:$0xf]
  %v347 = vld [vmem:[%s7 + $0x24] sm:$0xf]
  %v348 = vld [vmem:[%s7 + $0x28] sm:$0xf]
  %v349 = vld [vmem:[%s7 + $0x2c] sm:$0xf]
  %v350 = vld [vmem:[%s7 + $0x30] sm:$0xf]
  %v351 = vld [vmem:[%s7 + $0x34] sm:$0xf]
  %v352 = vld [vmem:[%s7 + $0x38] sm:$0xf]
  %v353 = vld [vmem:[%s7 + $0x3c] sm:$0xf]
  %v354 = vld [vmem:[%s8] sm:$0x1]
  %v356 = vlaneseq
  %v357 = vshrl.u32 %v356, 7
  %v358 = vsub.s32 0, %v357
  %v359 = vrot.slane %v354, %v358
  %v377 = vunpack.c.l.b16 %v338
  %v378 = vunpack.c.l.b16 %v339
  %v379 = vunpack.c.l.b16 %v340
  %v380 = vunpack.c.l.b16 %v341
  %v381 = vunpack.c.l.b16 %v342
  %v382 = vunpack.c.l.b16 %v343
  %v383 = vunpack.c.l.b16 %v344
  %v384 = vunpack.c.l.b16 %v345
  %v385 = vunpack.c.l.b16 %v346
  %v386 = vunpack.c.l.b16 %v347
  %v387 = vunpack.c.l.b16 %v348
  %v388 = vunpack.c.l.b16 %v349
  %v389 = vunpack.c.l.b16 %v350
  %v390 = vunpack.c.l.b16 %v351
  %v391 = vunpack.c.l.b16 %v352
  %v392 = vunpack.c.l.b16 %v353
  %v393 = vpack.c.b16 %v378, %v377
  %v394 = vpack.c.b16 %v380, %v379
  %v395 = vpack.c.b16 %v382, %v381
  %v396 = vpack.c.b16 %v384, %v383
  %v397 = vpack.c.b16 %v386, %v385
  %v398 = vpack.c.b16 %v388, %v387
  %v399 = vpack.c.b16 %v390, %v389
  %v400 = vpack.c.b16 %v392, %v391
  %409 = vmatprep.subr.bf16.mxu0 0
  %410 = vmatpush1.bf16.msra.mxu0 %v400
  %411 = vmatprep.subr.bf16.mxu0 0
  %412 = vmatpush1.bf16.msra.mxu0 %v399
  %413 = vmatprep.subr.bf16.mxu0 0
  %414 = vmatpush1.bf16.msra.mxu0 %v398
  %415 = vmatprep.subr.bf16.mxu0 0
  %416 = vmatpush1.bf16.msra.mxu0 %v397
  %417 = vmatprep.subr.bf16.mxu0 0
  %418 = vmatpush1.bf16.msra.mxu0 %v396
  %419 = vmatprep.subr.bf16.mxu0 0
  %420 = vmatpush1.bf16.msra.mxu0 %v395
  %421 = vmatprep.subr.bf16.mxu0 0
  %422 = vmatpush1.bf16.msra.mxu0 %v394
  %423 = vmatprep.subr.bf16.mxu0 0
  %424 = vmatpush1.bf16.msra.mxu0 %v393
  %425 = vmatprep.subr.bf16.mxu0 0
  %426 = vmatpush2.bf16.msra.mxu0 0
  %427 = vmatprep.subr.bf16.mxu0 0
  %428 = vmatpush2.bf16.msra.mxu0 0
  %429 = vmatprep.subr.bf16.mxu0 0
  %430 = vmatpush2.bf16.msra.mxu0 0
  %431 = vmatprep.subr.bf16.mxu0 0
  %432 = vmatpush2.bf16.msra.mxu0 0
  %433 = vmatprep.subr.bf16.mxu0 0
  %434 = vmatpush2.bf16.msra.mxu0 0
  %435 = vmatprep.subr.bf16.mxu0 0
  %436 = vmatpush2.bf16.msra.mxu0 0
  %437 = vmatprep.subr.bf16.mxu0 0
  %438 = vmatpush2.bf16.msra.mxu0 0
  %439 = vmatprep.subr.bf16.mxu0 0
  %440 = vmatpush2.bf16.msra.mxu0 0
  %441 = vmatprep.mubr.bf16.mxu0 0
  %442 = vmatmul.mubr.bf16.gmra.mxu0 %v336
  %v443 = vpop.f32.mrf.mxu0
  %v444 = vadd.f32 %v359, %v443
  %v445 = vpop.f32.mrf.mxu0
  %v446 = vpop.f32.mrf.mxu0
  %v447 = vadd.f32 %v359, %v446
  %v448 = vpop.f32.mrf.mxu0
  %449 = vmatprep.mubr.bf16.mxu0 0
  %450 = vmatmul.mubr.bf16.gmra.mxu0 %v337
  %v451 = vpop.f32.mrf.mxu0
  %v452 = vadd.f32 %v359, %v451
  %v453 = vpop.f32.mrf.mxu0
  %v454 = vpop.f32.mrf.mxu0
  %v455 = vadd.f32 %v359, %v454
  %v456 = vpop.f32.mrf.mxu0
  %457 = vdwg.mxu0
  %v458 = vmax.f32 %v444, 0.0
  %v459 = vmax.f32 %v447, 0.0
  %v460 = vmax.f32 %v452, 0.0
  %v461 = vmax.f32 %v455, 0.0
  %v462 = vpack.c.bf16 %v102, %v99
  %v463 = vld [vmem:[%s9] sm:$0xf]
  %v464 = vld [vmem:[%s9 + $0x4] sm:$0xf]
  %v465 = vld [vmem:[%s9 + $0x8] sm:$0xf]
  %v466 = vld [vmem:[%s9 + $0xc] sm:$0xf]
  %v467 = vld [vmem:[%s9 + $0x10] sm:$0xf]
  %v468 = vld [vmem:[%s9 + $0x14] sm:$0xf]
  %v469 = vld [vmem:[%s9 + $0x18] sm:$0xf]
  %v470 = vld [vmem:[%s9 + $0x1c] sm:$0xf]
  %v471 = vld [vmem:[%s9 + $0x20] sm:$0xf]
  %v472 = vld [vmem:[%s9 + $0x24] sm:$0xf]
  %v473 = vld [vmem:[%s9 + $0x28] sm:$0xf]
  %v474 = vld [vmem:[%s9 + $0x2c] sm:$0xf]
  %v475 = vld [vmem:[%s9 + $0x30] sm:$0xf]
  %v476 = vld [vmem:[%s9 + $0x34] sm:$0xf]
  %v477 = vld [vmem:[%s9 + $0x38] sm:$0xf]
  %v478 = vld [vmem:[%s9 + $0x3c] sm:$0xf]
  %v479 = vld [vmem:[%s10] sm:$0x1]
  %v481 = vlaneseq
  %v482 = vshrl.u32 %v481, 7
  %v483 = vsub.s32 0, %v482
  %v484 = vrot.slane %v479, %v483
  %v502 = vunpack.c.l.b16 %v463
  %v503 = vunpack.c.l.b16 %v464
  %v504 = vunpack.c.l.b16 %v465
  %v505 = vunpack.c.l.b16 %v466
  %v506 = vunpack.c.l.b16 %v467
  %v507 = vunpack.c.l.b16 %v468
  %v508 = vunpack.c.l.b16 %v469
  %v509 = vunpack.c.l.b16 %v470
  %v510 = vunpack.c.l.b16 %v471
  %v511 = vunpack.c.l.b16 %v472
  %v512 = vunpack.c.l.b16 %v473
  %v513 = vunpack.c.l.b16 %v474
  %v514 = vunpack.c.l.b16 %v475
  %v515 = vunpack.c.l.b16 %v476
  %v516 = vunpack.c.l.b16 %v477
  %v517 = vunpack.c.l.b16 %v478
  %v518 = vpack.c.b16 %v503, %v502
  %v519 = vpack.c.b16 %v505, %v504
  %v520 = vpack.c.b16 %v507, %v506
  %v521 = vpack.c.b16 %v509, %v508
  %v522 = vpack.c.b16 %v511, %v510
  %v523 = vpack.c.b16 %v513, %v512
  %v524 = vpack.c.b16 %v515, %v514
  %v525 = vpack.c.b16 %v517, %v516
  %534 = vmatprep.subr.bf16.mxu0 0
  %535 = vmatpush1.bf16.msra.mxu0 %v525
  %536 = vmatprep.subr.bf16.mxu0 0
  %537 = vmatpush1.bf16.msra.mxu0 %v524
  %538 = vmatprep.subr.bf16.mxu0 0
  %539 = vmatpush1.bf16.msra.mxu0 %v523
  %540 = vmatprep.subr.bf16.mxu0 0
  %541 = vmatpush1.bf16.msra.mxu0 %v522
  %542 = vmatprep.subr.bf16.mxu0 0
  %543 = vmatpush1.bf16.msra.mxu0 %v521
  %544 = vmatprep.subr.bf16.mxu0 0
  %545 = vmatpush1.bf16.msra.mxu0 %v520
  %546 = vmatprep.subr.bf16.mxu0 0
  %547 = vmatpush1.bf16.msra.mxu0 %v519
  %548 = vmatprep.subr.bf16.mxu0 0
  %549 = vmatpush1.bf16.msra.mxu0 %v518
  %550 = vmatprep.subr.bf16.mxu0 0
  %551 = vmatpush2.bf16.msra.mxu0 0
  %552 = vmatprep.subr.bf16.mxu0 0
  %553 = vmatpush2.bf16.msra.mxu0 0
  %554 = vmatprep.subr.bf16.mxu0 0
  %555 = vmatpush2.bf16.msra.mxu0 0
  %556 = vmatprep.subr.bf16.mxu0 0
  %557 = vmatpush2.bf16.msra.mxu0 0
  %558 = vmatprep.subr.bf16.mxu0 0
  %559 = vmatpush2.bf16.msra.mxu0 0
  %560 = vmatprep.subr.bf16.mxu0 0
  %561 = vmatpush2.bf16.msra.mxu0 0
  %562 = vmatprep.subr.bf16.mxu0 0
  %563 = vmatpush2.bf16.msra.mxu0 0
  %564 = vmatprep.subr.bf16.mxu0 0
  %565 = vmatpush2.bf16.msra.mxu0 0
  %566 = vmatprep.mubr.bf16.mxu0 0
  %567 = vmatmul.mubr.bf16.gmra.mxu0 %v462
  %v568 = vpop.f32.mrf.mxu0
  %v569 = vadd.f32 %v484, %v568
  %v570 = vpop.f32.mrf.mxu0
  %v571 = vpop.f32.mrf.mxu0
  %v572 = vadd.f32 %v484, %v571
  %v573 = vpop.f32.mrf.mxu0
  %574 = vdwg.mxu0
  %v575 = vmax.f32 %v569, 0.0
  %v576 = vmax.f32 %v572, 0.0
  %v577 = vadd.f32 %v575, %v576
  %v578 = vrot.slane %v577, 4
  %v579 = vadd.f32 %v577, %v578
  %v580 = vrot.slane %v579, 2
  %v581 = vadd.f32 %v579, %v580
  %v582 = vrot.slane %v581, 1
  %v583 = vadd.f32 %v581, %v582
  %v584 = vrcp.pop 16.0
  %v585 = vmul.f32 %v583, %v584
  %v586 = vadd.f32 %v458, %v585
  %v587 = vadd.f32 %v459, %v585
  %v588 = vadd.f32 %v460, %v585
  %v589 = vadd.f32 %v461, %v585
  %v590 = vpack.c.bf16 %v587, %v586
  %v591 = vpack.c.bf16 %v589, %v588
  %592 = vmatprep.subr.bf16.mxu0 0
  %593 = vmatpush1.bf16.msra.mxu0 0
  %594 = vmatprep.subr.bf16.mxu0 0
  %595 = vmatpush1.bf16.msra.mxu0 0
  %596 = vmatprep.subr.bf16.mxu0 0
  %597 = vmatpush1.bf16.msra.mxu0 0
  %598 = vmatprep.subr.bf16.mxu0 0
  %599 = vmatpush1.bf16.msra.mxu0 0
  %600 = vmatprep.subr.bf16.mxu0 0
  %601 = vmatpush1.bf16.msra.mxu0 0
  %602 = vmatprep.subr.bf16.mxu0 0
  %603 = vmatpush1.bf16.msra.mxu0 0
  %604 = vmatprep.subr.bf16.mxu0 0
  %605 = vmatpush1.bf16.msra.mxu0 %v591
  %606 = vmatprep.subr.bf16.mxu0 0
  %607 = vmatpush1.bf16.msra.mxu0 %v590
  %608 = vmatprep.subr.bf16.mxu0 0
  %609 = vmatpush2.bf16.msra.mxu0 0
  %610 = vmatprep.subr.bf16.mxu0 0
  %611 = vmatpush2.bf16.msra.mxu0 0
  %612 = vmatprep.subr.bf16.mxu0 0
  %613 = vmatpush2.bf16.msra.mxu0 0
  %614 = vmatprep.subr.bf16.mxu0 0
  %615 = vmatpush2.bf16.msra.mxu0 0
  %616 = vmatprep.subr.bf16.mxu0 0
  %617 = vmatpush2.bf16.msra.mxu0 0
  %618 = vmatprep.subr.bf16.mxu0 0
  %619 = vmatpush2.bf16.msra.mxu0 0
  %620 = vmatprep.subr.bf16.mxu0 0
  %621 = vmatpush2.bf16.msra.mxu0 0
  %622 = vmatprep.subr.bf16.mxu0 0
  %623 = vmatpush2.bf16.msra.mxu0 0
  %624 = vmatprep.mubr.bf16.mxu0 0
  %625 = vmatmul.mubr.bf16.gmra.mxu0 %v62
  %v626 = vpop.f32.mrf.mxu0
  %v627 = vadd.f32 0.0, %v626
  %v628 = vpop.f32.mrf.mxu0
  %v629 = vpop.f32.mrf.mxu0
  %v630 = vadd.f32 0.0, %v629
  %v631 = vpop.f32.mrf.mxu0
  %632 = vdwg.mxu0
  %633 = vmatprep.subr.bf16.mxu0 0
  %634 = vmatpush1.bf16.msra.mxu0 0
  %635 = vmatprep.subr.bf16.mxu0 0
  %636 = vmatpush1.bf16.msra.mxu0 0
  %637 = vmatprep.subr.bf16.mxu0 0
  %638 = vmatpush1.bf16.msra.mxu0 0
  %639 = vmatprep.subr.bf16.mxu0 0
  %640 = vmatpush1.bf16.msra.mxu0 0
  %641 = vmatprep.subr.bf16.mxu0 0
  %642 = vmatpush1.bf16.msra.mxu0 0
  %643 = vmatprep.subr.bf16.mxu0 0
  %644 = vmatpush1.bf16.msra.mxu0 0
  %645 = vmatprep.subr.bf16.mxu0 0
  %646 = vmatpush1.bf16.msra.mxu0 %v591
  %647 = vmatprep.subr.bf16.mxu0 0
  %648 = vmatpush1.bf16.msra.mxu0 %v590
  %649 = vmatprep.subr.bf16.mxu0 0
  %650 = vmatpush2.bf16.msra.mxu0 0
  %651 = vmatprep.subr.bf16.mxu0 0
  %652 = vmatpush2.bf16.msra.mxu0 0
  %653 = vmatprep.subr.bf16.mxu0 0
  %654 = vmatpush2.bf16.msra.mxu0 0
  %655 = vmatprep.subr.bf16.mxu0 0
  %656 = vmatpush2.bf16.msra.mxu0 0
  %657 = vmatprep.subr.bf16.mxu0 0
  %658 = vmatpush2.bf16.msra.mxu0 0
  %659 = vmatprep.subr.bf16.mxu0 0
  %660 = vmatpush2.bf16.msra.mxu0 0
  %661 = vmatprep.subr.bf16.mxu0 0
  %662 = vmatpush2.bf16.msra.mxu0 0
  %663 = vmatprep.subr.bf16.mxu0 0
  %664 = vmatpush2.bf16.msra.mxu0 0
  %665 = vmatprep.mubr.bf16.mxu0 0
  %666 = vmatmul.mubr.bf16.gmra.mxu0 %v111
  %v667 = vpop.f32.mrf.mxu0
  %v668 = vadd.f32 0.0, %v667
  %v669 = vpop.f32.mrf.mxu0
  %v670 = vpop.f32.mrf.mxu0
  %v671 = vadd.f32 0.0, %v670
  %v672 = vpop.f32.mrf.mxu0
  %673 = vdwg.mxu0
  %v674 = vpack.c.bf16 %v671, %v668
  %s675 = scalar_lea.vmem %s5, 64
  %v676 = vld [vmem:[%s675] sm:$0xf]
  %v677 = vld [vmem:[%s675 + $0x4] sm:$0xf]
  %v678 = vld [vmem:[%s675 + $0x8] sm:$0xf]
  %v679 = vld [vmem:[%s675 + $0xc] sm:$0xf]
  %v680 = vld [vmem:[%s675 + $0x10] sm:$0xf]
  %v681 = vld [vmem:[%s675 + $0x14] sm:$0xf]
  %v682 = vld [vmem:[%s675 + $0x18] sm:$0xf]
  %v683 = vld [vmem:[%s675 + $0x1c] sm:$0xf]
  %v684 = vld [vmem:[%s675 + $0x20] sm:$0xf]
  %v685 = vld [vmem:[%s675 + $0x24] sm:$0xf]
  %v686 = vld [vmem:[%s675 + $0x28] sm:$0xf]
  %v687 = vld [vmem:[%s675 + $0x2c] sm:$0xf]
  %v688 = vld [vmem:[%s675 + $0x30] sm:$0xf]
  %v689 = vld [vmem:[%s675 + $0x34] sm:$0xf]
  %v690 = vld [vmem:[%s675 + $0x38] sm:$0xf]
  %v691 = vld [vmem:[%s675 + $0x3c] sm:$0xf]
  %s692 = scalar_lea.vmem %s6, 1
  %v693 = vld [vmem:[%s692] sm:$0x1]
  %v695 = vlaneseq
  %v696 = vshrl.u32 %v695, 7
  %v697 = vsub.s32 0, %v696
  %v698 = vrot.slane %v693, %v697
  %v716 = vunpack.c.l.b16 %v676
  %v717 = vunpack.c.l.b16 %v677
  %v718 = vunpack.c.l.b16 %v678
  %v719 = vunpack.c.l.b16 %v679
  %v720 = vunpack.c.l.b16 %v680
  %v721 = vunpack.c.l.b16 %v681
  %v722 = vunpack.c.l.b16 %v682
  %v723 = vunpack.c.l.b16 %v683
  %v724 = vunpack.c.l.b16 %v684
  %v725 = vunpack.c.l.b16 %v685
  %v726 = vunpack.c.l.b16 %v686
  %v727 = vunpack.c.l.b16 %v687
  %v728 = vunpack.c.l.b16 %v688
  %v729 = vunpack.c.l.b16 %v689
  %v730 = vunpack.c.l.b16 %v690
  %v731 = vunpack.c.l.b16 %v691
  %v732 = vpack.c.b16 %v717, %v716
  %v733 = vpack.c.b16 %v719, %v718
  %v734 = vpack.c.b16 %v721, %v720
  %v735 = vpack.c.b16 %v723, %v722
  %v736 = vpack.c.b16 %v725, %v724
  %v737 = vpack.c.b16 %v727, %v726
  %v738 = vpack.c.b16 %v729, %v728
  %v739 = vpack.c.b16 %v731, %v730
  %748 = vmatprep.subr.bf16.mxu0 0
  %749 = vmatpush1.bf16.msra.mxu0 %v739
  %750 = vmatprep.subr.bf16.mxu0 0
  %751 = vmatpush1.bf16.msra.mxu0 %v738
  %752 = vmatprep.subr.bf16.mxu0 0
  %753 = vmatpush1.bf16.msra.mxu0 %v737
  %754 = vmatprep.subr.bf16.mxu0 0
  %755 = vmatpush1.bf16.msra.mxu0 %v736
  %756 = vmatprep.subr.bf16.mxu0 0
  %757 = vmatpush1.bf16.msra.mxu0 %v735
  %758 = vmatprep.subr.bf16.mxu0 0
  %759 = vmatpush1.bf16.msra.mxu0 %v734
  %760 = vmatprep.subr.bf16.mxu0 0
  %761 = vmatpush1.bf16.msra.mxu0 %v733
  %762 = vmatprep.subr.bf16.mxu0 0
  %763 = vmatpush1.bf16.msra.mxu0 %v732
  %764 = vmatprep.subr.bf16.mxu0 0
  %765 = vmatpush2.bf16.msra.mxu0 0
  %766 = vmatprep.subr.bf16.mxu0 0
  %767 = vmatpush2.bf16.msra.mxu0 0
  %768 = vmatprep.subr.bf16.mxu0 0
  %769 = vmatpush2.bf16.msra.mxu0 0
  %770 = vmatprep.subr.bf16.mxu0 0
  %771 = vmatpush2.bf16.msra.mxu0 0
  %772 = vmatprep.subr.bf16.mxu0 0
  %773 = vmatpush2.bf16.msra.mxu0 0
  %774 = vmatprep.subr.bf16.mxu0 0
  %775 = vmatpush2.bf16.msra.mxu0 0
  %776 = vmatprep.subr.bf16.mxu0 0
  %777 = vmatpush2.bf16.msra.mxu0 0
  %778 = vmatprep.subr.bf16.mxu0 0
  %779 = vmatpush2.bf16.msra.mxu0 0
  %780 = vmatprep.mubr.bf16.mxu0 0
  %781 = vmatmul.mubr.bf16.gmra.mxu0 %v674
  %v782 = vpop.f32.mrf.mxu0
  %v783 = vadd.f32 %v698, %v782
  %v784 = vpop.f32.mrf.mxu0
  %v785 = vpop.f32.mrf.mxu0
  %v786 = vadd.f32 %v698, %v785
  %v787 = vpop.f32.mrf.mxu0
  %788 = vdwg.mxu0
  %v789 = vmax.f32 %v783, 0.0
  %v790 = vmax.f32 %v786, 0.0
  %v791 = vpack.c.bf16 %v790, %v789
  %792 = vmatprep.subr.bf16.mxu0 0
  %793 = vmatpush1.bf16.msra.mxu0 0
  %794 = vmatprep.subr.bf16.mxu0 0
  %795 = vmatpush1.bf16.msra.mxu0 0
  %796 = vmatprep.subr.bf16.mxu0 0
  %797 = vmatpush1.bf16.msra.mxu0 0
  %798 = vmatprep.subr.bf16.mxu0 0
  %799 = vmatpush1.bf16.msra.mxu0 0
  %800 = vmatprep.subr.bf16.mxu0 0
  %801 = vmatpush1.bf16.msra.mxu0 0
  %802 = vmatprep.subr.bf16.mxu0 0
  %803 = vmatpush1.bf16.msra.mxu0 0
  %804 = vmatprep.subr.bf16.mxu0 0
  %805 = vmatpush1.bf16.msra.mxu0 0
  %806 = vmatprep.subr.bf16.mxu0 0
  %807 = vmatpush1.bf16.msra.mxu0 %v791
  %808 = vmatprep.subr.bf16.mxu0 0
  %809 = vmatpush2.bf16.msra.mxu0 0
  %810 = vmatprep.subr.bf16.mxu0 0
  %811 = vmatpush2.bf16.msra.mxu0 0
  %812 = vmatprep.subr.bf16.mxu0 0
  %813 = vmatpush2.bf16.msra.mxu0 0
  %814 = vmatprep.subr.bf16.mxu0 0
  %815 = vmatpush2.bf16.msra.mxu0 0
  %816 = vmatprep.subr.bf16.mxu0 0
  %817 = vmatpush2.bf16.msra.mxu0 0
  %818 = vmatprep.subr.bf16.mxu0 0
  %819 = vmatpush2.bf16.msra.mxu0 0
  %820 = vmatprep.subr.bf16.mxu0 0
  %821 = vmatpush2.bf16.msra.mxu0 0
  %822 = vmatprep.subr.bf16.mxu0 0
  %823 = vmatpush2.bf16.msra.mxu0 0
  %824 = vmatprep.mubr.bf16.mxu0 0
  %825 = vmatmul.mubr.bf16.gmra.mxu0 %v282
  %v826 = vpop.f32.mrf.mxu0
  %v827 = vadd.f32 0.0, %v826
  %v828 = vpop.f32.mrf.mxu0
  %v829 = vpop.f32.mrf.mxu0
  %v830 = vadd.f32 0.0, %v829
  %v831 = vpop.f32.mrf.mxu0
  %832 = vmatprep.mubr.bf16.mxu0 0
  %833 = vmatmul.mubr.bf16.gmra.mxu0 %v285
  %v834 = vpop.f32.mrf.mxu0
  %v835 = vadd.f32 0.0, %v834
  %v836 = vpop.f32.mrf.mxu0
  %v837 = vpop.f32.mrf.mxu0
  %v838 = vadd.f32 0.0, %v837
  %v839 = vpop.f32.mrf.mxu0
  %840 = vdwg.mxu0
  %v841 = vpack.c.bf16 %v830, %v827
  %v842 = vpack.c.bf16 %v838, %v835
  %s843 = scalar_lea.vmem %s7, 64
  %v844 = vld [vmem:[%s843] sm:$0xf]
  %v845 = vld [vmem:[%s843 + $0x4] sm:$0xf]
  %v846 = vld [vmem:[%s843 + $0x8] sm:$0xf]
  %v847 = vld [vmem:[%s843 + $0xc] sm:$0xf]
  %v848 = vld [vmem:[%s843 + $0x10] sm:$0xf]
  %v849 = vld [vmem:[%s843 + $0x14] sm:$0xf]
  %v850 = vld [vmem:[%s843 + $0x18] sm:$0xf]
  %v851 = vld [vmem:[%s843 + $0x1c] sm:$0xf]
  %v852 = vld [vmem:[%s843 + $0x20] sm:$0xf]
  %v853 = vld [vmem:[%s843 + $0x24] sm:$0xf]
  %v854 = vld [vmem:[%s843 + $0x28] sm:$0xf]
  %v855 = vld [vmem:[%s843 + $0x2c] sm:$0xf]
  %v856 = vld [vmem:[%s843 + $0x30] sm:$0xf]
  %v857 = vld [vmem:[%s843 + $0x34] sm:$0xf]
  %v858 = vld [vmem:[%s843 + $0x38] sm:$0xf]
  %v859 = vld [vmem:[%s843 + $0x3c] sm:$0xf]
  %s860 = scalar_lea.vmem %s8, 1
  %v861 = vld [vmem:[%s860] sm:$0x1]
  %v863 = vlaneseq
  %v864 = vshrl.u32 %v863, 7
  %v865 = vsub.s32 0, %v864
  %v866 = vrot.slane %v861, %v865
  %v884 = vunpack.c.l.b16 %v844
  %v885 = vunpack.c.l.b16 %v845
  %v886 = vunpack.c.l.b16 %v846
  %v887 = vunpack.c.l.b16 %v847
  %v888 = vunpack.c.l.b16 %v848
  %v889 = vunpack.c.l.b16 %v849
  %v890 = vunpack.c.l.b16 %v850
  %v891 = vunpack.c.l.b16 %v851
  %v892 = vunpack.c.l.b16 %v852
  %v893 = vunpack.c.l.b16 %v853
  %v894 = vunpack.c.l.b16 %v854
  %v895 = vunpack.c.l.b16 %v855
  %v896 = vunpack.c.l.b16 %v856
  %v897 = vunpack.c.l.b16 %v857
  %v898 = vunpack.c.l.b16 %v858
  %v899 = vunpack.c.l.b16 %v859
  %v900 = vpack.c.b16 %v885, %v884
  %v901 = vpack.c.b16 %v887, %v886
  %v902 = vpack.c.b16 %v889, %v888
  %v903 = vpack.c.b16 %v891, %v890
  %v904 = vpack.c.b16 %v893, %v892
  %v905 = vpack.c.b16 %v895, %v894
  %v906 = vpack.c.b16 %v897, %v896
  %v907 = vpack.c.b16 %v899, %v898
  %916 = vmatprep.subr.bf16.mxu0 0
  %917 = vmatpush1.bf16.msra.mxu0 %v907
  %918 = vmatprep.subr.bf16.mxu0 0
  %919 = vmatpush1.bf16.msra.mxu0 %v906
  %920 = vmatprep.subr.bf16.mxu0 0
  %921 = vmatpush1.bf16.msra.mxu0 %v905
  %922 = vmatprep.subr.bf16.mxu0 0
  %923 = vmatpush1.bf16.msra.mxu0 %v904
  %924 = vmatprep.subr.bf16.mxu0 0
  %925 = vmatpush1.bf16.msra.mxu0 %v903
  %926 = vmatprep.subr.bf16.mxu0 0
  %927 = vmatpush1.bf16.msra.mxu0 %v902
  %928 = vmatprep.subr.bf16.mxu0 0
  %929 = vmatpush1.bf16.msra.mxu0 %v901
  %930 = vmatprep.subr.bf16.mxu0 0
  %931 = vmatpush1.bf16.msra.mxu0 %v900
  %932 = vmatprep.subr.bf16.mxu0 0
  %933 = vmatpush2.bf16.msra.mxu0 0
  %934 = vmatprep.subr.bf16.mxu0 0
  %935 = vmatpush2.bf16.msra.mxu0 0
  %936 = vmatprep.subr.bf16.mxu0 0
  %937 = vmatpush2.bf16.msra.mxu0 0
  %938 = vmatprep.subr.bf16.mxu0 0
  %939 = vmatpush2.bf16.msra.mxu0 0
  %940 = vmatprep.subr.bf16.mxu0 0
  %941 = vmatpush2.bf16.msra.mxu0 0
  %942 = vmatprep.subr.bf16.mxu0 0
  %943 = vmatpush2.bf16.msra.mxu0 0
  %944 = vmatprep.subr.bf16.mxu0 0
  %945 = vmatpush2.bf16.msra.mxu0 0
  %946 = vmatprep.subr.bf16.mxu0 0
  %947 = vmatpush2.bf16.msra.mxu0 0
  %948 = vmatprep.mubr.bf16.mxu0 0
  %949 = vmatmul.mubr.bf16.gmra.mxu0 %v841
  %v950 = vpop.f32.mrf.mxu0
  %v951 = vadd.f32 %v866, %v950
  %v952 = vpop.f32.mrf.mxu0
  %v953 = vpop.f32.mrf.mxu0
  %v954 = vadd.f32 %v866, %v953
  %v955 = vpop.f32.mrf.mxu0
  %956 = vmatprep.mubr.bf16.mxu0 0
  %957 = vmatmul.mubr.bf16.gmra.mxu0 %v842
  %v958 = vpop.f32.mrf.mxu0
  %v959 = vadd.f32 %v866, %v958
  %v960 = vpop.f32.mrf.mxu0
  %v961 = vpop.f32.mrf.mxu0
  %v962 = vadd.f32 %v866, %v961
  %v963 = vpop.f32.mrf.mxu0
  %964 = vdwg.mxu0
  %v965 = vmax.f32 %v951, 0.0
  %v966 = vmax.f32 %v954, 0.0
  %v967 = vmax.f32 %v959, 0.0
  %v968 = vmax.f32 %v962, 0.0
  %v969 = vpack.c.bf16 %v630, %v627
  %s970 = scalar_lea.vmem %s9, 64
  %v971 = vld [vmem:[%s970] sm:$0xf]
  %v972 = vld [vmem:[%s970 + $0x4] sm:$0xf]
  %v973 = vld [vmem:[%s970 + $0x8] sm:$0xf]
  %v974 = vld [vmem:[%s970 + $0xc] sm:$0xf]
  %v975 = vld [vmem:[%s970 + $0x10] sm:$0xf]
  %v976 = vld [vmem:[%s970 + $0x14] sm:$0xf]
  %v977 = vld [vmem:[%s970 + $0x18] sm:$0xf]
  %v978 = vld [vmem:[%s970 + $0x1c] sm:$0xf]
  %v979 = vld [vmem:[%s970 + $0x20] sm:$0xf]
  %v980 = vld [vmem:[%s970 + $0x24] sm:$0xf]
  %v981 = vld [vmem:[%s970 + $0x28] sm:$0xf]
  %v982 = vld [vmem:[%s970 + $0x2c] sm:$0xf]
  %v983 = vld [vmem:[%s970 + $0x30] sm:$0xf]
  %v984 = vld [vmem:[%s970 + $0x34] sm:$0xf]
  %v985 = vld [vmem:[%s970 + $0x38] sm:$0xf]
  %v986 = vld [vmem:[%s970 + $0x3c] sm:$0xf]
  %s987 = scalar_lea.vmem %s10, 1
  %v988 = vld [vmem:[%s987] sm:$0x1]
  %v990 = vlaneseq
  %v991 = vshrl.u32 %v990, 7
  %v992 = vsub.s32 0, %v991
  %v993 = vrot.slane %v988, %v992
  %v1011 = vunpack.c.l.b16 %v971
  %v1012 = vunpack.c.l.b16 %v972
  %v1013 = vunpack.c.l.b16 %v973
  %v1014 = vunpack.c.l.b16 %v974
  %v1015 = vunpack.c.l.b16 %v975
  %v1016 = vunpack.c.l.b16 %v976
  %v1017 = vunpack.c.l.b16 %v977
  %v1018 = vunpack.c.l.b16 %v978
  %v1019 = vunpack.c.l.b16 %v979
  %v1020 = vunpack.c.l.b16 %v980
  %v1021 = vunpack.c.l.b16 %v981
  %v1022 = vunpack.c.l.b16 %v982
  %v1023 = vunpack.c.l.b16 %v983
  %v1024 = vunpack.c.l.b16 %v984
  %v1025 = vunpack.c.l.b16 %v985
  %v1026 = vunpack.c.l.b16 %v986
  %v1027 = vpack.c.b16 %v1012, %v1011
  %v1028 = vpack.c.b16 %v1014, %v1013
  %v1029 = vpack.c.b16 %v1016, %v1015
  %v1030 = vpack.c.b16 %v1018, %v1017
  %v1031 = vpack.c.b16 %v1020, %v1019
  %v1032 = vpack.c.b16 %v1022, %v1021
  %v1033 = vpack.c.b16 %v1024, %v1023
  %v1034 = vpack.c.b16 %v1026, %v1025
  %1043 = vmatprep.subr.bf16.mxu0 0
  %1044 = vmatpush1.bf16.msra.mxu0 %v1034
  %1045 = vmatprep.subr.bf16.mxu0 0
  %1046 = vmatpush1.bf16.msra.mxu0 %v1033
  %1047 = vmatprep.subr.bf16.mxu0 0
  %1048 = vmatpush1.bf16.msra.mxu0 %v1032
  %1049 = vmatprep.subr.bf16.mxu0 0
  %1050 = vmatpush1.bf16.msra.mxu0 %v1031
  %1051 = vmatprep.subr.bf16.mxu0 0
  %1052 = vmatpush1.bf16.msra.mxu0 %v1030
  %1053 = vmatprep.subr.bf16.mxu0 0
  %1054 = vmatpush1.bf16.msra.mxu0 %v1029
  %1055 = vmatprep.subr.bf16.mxu0 0
  %1056 = vmatpush1.bf16.msra.mxu0 %v1028
  %1057 = vmatprep.subr.bf16.mxu0 0
  %1058 = vmatpush1.bf16.msra.mxu0 %v1027
  %1059 = vmatprep.subr.bf16.mxu0 0
  %1060 = vmatpush2.bf16.msra.mxu0 0
  %1061 = vmatprep.subr.bf16.mxu0 0
  %1062 = vmatpush2.bf16.msra.mxu0 0
  %1063 = vmatprep.subr.bf16.mxu0 0
  %1064 = vmatpush2.bf16.msra.mxu0 0
  %1065 = vmatprep.subr.bf16.mxu0 0
  %1066 = vmatpush2.bf16.msra.mxu0 0
  %1067 = vmatprep.subr.bf16.mxu0 0
  %1068 = vmatpush2.bf16.msra.mxu0 0
  %1069 = vmatprep.subr.bf16.mxu0 0
  %1070 = vmatpush2.bf16.msra.mxu0 0
  %1071 = vmatprep.subr.bf16.mxu0 0
  %1072 = vmatpush2.bf16.msra.mxu0 0
  %1073 = vmatprep.subr.bf16.mxu0 0
  %1074 = vmatpush2.bf16.msra.mxu0 0
  %1075 = vmatprep.mubr.bf16.mxu0 0
  %1076 = vmatmul.mubr.bf16.gmra.mxu0 %v969
  %v1077 = vpop.f32.mrf.mxu0
  %v1078 = vadd.f32 %v993, %v1077
  %v1079 = vpop.f32.mrf.mxu0
  %v1080 = vpop.f32.mrf.mxu0
  %v1081 = vadd.f32 %v993, %v1080
  %v1082 = vpop.f32.mrf.mxu0
  %1083 = vdwg.mxu0
  %v1084 = vmax.f32 %v1078, 0.0
  %v1085 = vmax.f32 %v1081, 0.0
  %v1086 = vadd.f32 %v1084, %v1085
  %v1087 = vrot.slane %v1086, 4
  %v1088 = vadd.f32 %v1086, %v1087
  %v1089 = vrot.slane %v1088, 2
  %v1090 = vadd.f32 %v1088, %v1089
  %v1091 = vrot.slane %v1090, 1
  %v1092 = vadd.f32 %v1090, %v1091
  %v1093 = vmul.f32 %v1092, %v584
  %v1094 = vadd.f32 %v965, %v1093
  %v1095 = vadd.f32 %v966, %v1093
  %v1096 = vadd.f32 %v967, %v1093
  %v1097 = vadd.f32 %v968, %v1093
  %1098 = vst [vmem:[%s11] sm:$0xff] %v1094
  %1099 = vst [vmem:[%s11 + $0x8] sm:$0xff] %v1095
  %1100 = vst [vmem:[%s11 + $0x10] sm:$0xff] %v1096
  %1101 = vst [vmem:[%s11 + $0x18] sm:$0xff] %v1097
  %1102 = vst [vmem:[%s12] sm:$0xff] %v789
  %1103 = vst [vmem:[%s12 + $0x8] sm:$0xff] %v790
  // Predicated region
  $region46: #{_lambda_.1} parent=0 // pred_check
    _
  $region47: #{_lambda_.1} parent=0 // pred_check_branch
    %1105 = sbr.rel (0) target = $region49
  $region48: #{_lambda_.1} parent=0 // pred_region
    _
  $region49: #{_lambda_.1} parent=0 // pred_fallthru
    _
  // Predicated region
  $region50: #{_lambda_.1} parent=0 // pred_check
    _
  $region51: #{_lambda_.1} parent=0 // pred_check_branch
    %1107 = sbr.rel (0) target = $region53
  $region52: #{_lambda_.1} parent=0 // pred_region
    _
  $region53: #{_lambda_.1} parent=0 // pred_fallthru
    _
  // Predicated region
  $region54: #{_lambda_.1} parent=0 // pred_check
    _
  $region55: #{_lambda_.1} parent=0 // pred_check_branch
    %1109 = sbr.rel (0) target = $region57
  $region56: #{_lambda_.1} parent=0 // pred_region
    _
  $region57: #{_lambda_.1} parent=0 // pred_fallthru
    _
  // Predicated region
  $region58: #{_lambda_.1} parent=0 // pred_check
    _
  $region59: #{_lambda_.1} parent=0 // pred_check_branch
    %1111 = sbr.rel (0) target = $region61
  $region60: #{_lambda_.1} parent=0 // pred_region
    _
  $region61: #{_lambda_.1} parent=0 // pred_fallthru
    _

</llo_original>
